<compile_context>
chip_gen: v7x
topology: tpu7x:2x2x1
jax: 0.10.0
libtpu: 0.0.40
codegen_flags: <defaults>
</compile_context>

<pallas_src>
import functools
import math

import jax
import jax.numpy as jnp
import numpy as np
from jax.experimental import pallas as pl
from jax.experimental.pallas import tpu as pltpu


def _round_up(v: int, m: int) -> int:
    return (v + m - 1) // m * m


def _cdiv(a: int, b: int) -> int:
    return -(-a // b)


def _sublane(dtype) -> int:
    # 8 sublanes for 32-bit, 16 for 16-bit, 32 for 8-bit dtypes.
    return max(8, 32 // jnp.dtype(dtype).itemsize)


def _vmem_capacity_bytes() -> int:
    try:
        info = pltpu.get_tpu_info()
        cap = getattr(info, "vmem_capacity_bytes", None)
        if cap:
            return int(cap)
    except Exception:
        pass
    return 64 * 2**20  # conservative fallback: v7x per-TC VMEM


def _patch_embed_kernel(x_ref, w_ref, b_ref, o_ref, *, compute_dtype):
    # x_ref: (tm, patch_dim) in x's native dtype; w_ref: (patch_dim, n) in
    # compute_dtype; b_ref: (1, n) f32.  Cast x on the VPU (free slot) instead
    # of a wrapper-side XLA pass over all of x in HBM.
    x = x_ref[...]
    if x.dtype != compute_dtype:
        x = x.astype(compute_dtype)
    acc = jnp.dot(x, w_ref[...], preferred_element_type=jnp.float32)
    o_ref[...] = (acc + b_ref[...]).astype(o_ref.dtype)


def patch_embedding(x, weight, bias, *, tm=None, compute_dtype=None, out_dtype=None):
    """y = x @ weight.T + bias.

    x: (..., patch_dim); weight: (embed_dim, patch_dim); bias: (embed_dim,).
    compute_dtype: optional matmul operand dtype (e.g. jnp.bfloat16); the MXU
                   accumulation and bias add stay in f32.
    out_dtype:     optional output dtype (default: x.dtype).
    tm:            optional row-tile override; by default derived from VMEM.
    """
    patch_dim = x.shape[-1]
    embed_dim = weight.shape[0]
    lead = x.shape[:-1]
    M = math.prod(lead) if lead else 1

    out_dt = jnp.dtype(out_dtype) if out_dtype is not None else jnp.dtype(x.dtype)
    cdt = jnp.dtype(compute_dtype) if compute_dtype is not None else jnp.dtype(x.dtype)

    x2 = x.reshape(M, patch_dim)                       # metadata-only reshape
    w = weight.T.astype(cdt)                           # (patch_dim, embed_dim), small
    b = bias.astype(jnp.float32).reshape(1, embed_dim)

    # Conditional lane padding: only pad when embed_dim >= 128 and pad <= 15%.
    # Otherwise use exact width (masked vst) to avoid extra output bytes + crop.
    n = embed_dim
    if embed_dim % 128 != 0 and embed_dim >= 128:
        n_padded = _round_up(embed_dim, 128)
        if (n_padded - embed_dim) <= 0.15 * embed_dim:
            n = n_padded
    if n != embed_dim:
        w = jnp.pad(w, ((0, 0), (0, n - embed_dim)))
        b = jnp.pad(b, ((0, 0), (0, n - embed_dim)))

    align = max(_sublane(x2.dtype), _sublane(out_dt))
    x_bytes = jnp.dtype(x2.dtype).itemsize
    w_bytes = cdt.itemsize
    o_bytes = out_dt.itemsize

    # Generation-aware VMEM cap: ~48 MiB on v7x (64 MiB VMEM), ~96 MiB on
    # v5e/v6e (128 MiB VMEM).  Never request the full physical capacity.
    vmem_cap = (_vmem_capacity_bytes() * 3) // 4

    if tm is None:
        per_row = 2 * (patch_dim * x_bytes + n * o_bytes)   # double-buffered x/out
        resident = 2 * patch_dim * n * w_bytes + 2 * n * 4  # W + bias buffers
        tile_budget = vmem_cap // 2 - resident               # 2x headroom below cap
        tm = tile_budget // per_row if tile_budget > 0 else align
        tm = min(max(int(tm), align), 4096)
    tm_eff = min(_round_up(int(tm), align), _round_up(M, align))
    tm_eff = max(tm_eff, align)
    # Megacore (v7x): make sure a large-M problem spans >= 2 grid steps so
    # both TensorCores get work.
    if _cdiv(M, tm_eff) < 2 and M >= 1024:
        tm_eff = _round_up(_cdiv(M, 2), align)

    grid = (_cdiv(M, tm_eff),)   # partial last block handled by Pallas (no x pad)

    vmem_needed = (
        2 * tm_eff * patch_dim * x_bytes    # x tiles (double-buffered)
        + 2 * tm_eff * n * o_bytes          # out tiles (double-buffered)
        + 2 * patch_dim * n * w_bytes       # W (resident, double-buffered)
        + 2 * n * 4                         # bias (f32)
    )
    vmem_limit = int(min(max(2 * vmem_needed, 32 * 2**20), vmem_cap))

    kernel = functools.partial(_patch_embed_kernel, compute_dtype=cdt)

    out = pl.pallas_call(
        kernel,
        out_shape=jax.ShapeDtypeStruct((M, n), out_dt),
        grid_spec=pltpu.PrefetchScalarGridSpec(
            num_scalar_prefetch=0,
            grid=grid,
            in_specs=[
                pl.BlockSpec((tm_eff, patch_dim), lambda i: (i, 0)),  # x row tile
                pl.BlockSpec((patch_dim, n), lambda i: (0, 0)),       # full W (resident)
                pl.BlockSpec((1, n), lambda i: (0, 0)),               # bias
            ],
            out_specs=pl.BlockSpec((tm_eff, n), lambda i: (i, 0)),
        ),
        compiler_params=pltpu.CompilerParams(
            dimension_semantics=("parallel",),   # rows independent -> megacore
            vmem_limit_bytes=vmem_limit,
        ),
    )(x2, w, b)

    if n != embed_dim:
        out = out[:, :embed_dim]   # crop only on the (rare) lane-padded path
    return out.reshape(*lead, embed_dim)


def init_linear_params(key, patch_dim, embed_dim, dtype=jnp.float32):
    # Deterministic init mimicking nn.Linear default (uniform +-1/sqrt(fan_in)).
    kw, kb = jax.random.split(key)
    bound = 1.0 / (patch_dim ** 0.5)
    weight = jax.random.uniform(kw, (embed_dim, patch_dim), dtype,
                                minval=-bound, maxval=bound)
    bias = jax.random.uniform(kb, (embed_dim,), dtype,
                              minval=-bound, maxval=bound)
    return weight, bias


def _np_ref(x, weight, bias):
    xf = np.asarray(x, dtype=np.float64)
    wf = np.asarray(weight, dtype=np.float64)
    bf = np.asarray(bias, dtype=np.float64)
    return xf @ wf.T + bf


if __name__ == "__main__":
    key = jax.random.PRNGKey(0)
    k_x, k_p1, k_p2 = jax.random.split(key, 3)

    # Small shapes: batch*seq = 18 exercises the partial (masked) row tile,
    # embed_dim = 64 exercises the no-pad masked-store output path.
    batch, seq, patch_dim, embed_dim = 2, 9, 32, 64
    x = jax.random.normal(k_x, (batch, seq, patch_dim), dtype=jnp.float32)
    weight, bias = init_linear_params(k_p1, patch_dim, embed_dim)
    y_ref = _np_ref(x, weight, bias)

    # 1) f32 path (default out_dtype = x.dtype).
    y = jax.block_until_ready(patch_embedding(x, weight, bias))
    assert y.shape == (batch, seq, embed_dim)
    assert np.allclose(np.asarray(y, np.float64), y_ref, atol=2e-2, rtol=2e-2)

    # 2) bf16 operands + bf16 output (f32 MXU accumulation), loosened tolerance.
    y_bf16 = jax.block_until_ready(
        patch_embedding(x, weight, bias,
                        compute_dtype=jnp.bfloat16, out_dtype=jnp.bfloat16))
    assert y_bf16.shape == (batch, seq, embed_dim)
    assert y_bf16.dtype == jnp.bfloat16
    assert np.allclose(np.asarray(y_bf16, np.float64), y_ref, atol=1e-1, rtol=1e-1)

    # 3) embed_dim = 240 exercises the conditional lane-pad (240 -> 256) + crop path.
    embed_dim2 = 240
    weight2, bias2 = init_linear_params(k_p2, patch_dim, embed_dim2)
    y2_ref = _np_ref(x, weight2, bias2)
    y2 = jax.block_until_ready(patch_embedding(x, weight2, bias2))
    assert y2.shape == (batch, seq, embed_dim2)
    assert np.allclose(np.asarray(y2, np.float64), y2_ref, atol=2e-2, rtol=2e-2)

    print("KERNEL_OK")
</pallas_src>

<mosaic_0001>
module attributes {stable_mosaic.version = 11 : i64} {
  func.func @_patch_embed_kernel(%arg0: i32, %arg1: memref<24x32xf32, #tpu.memory_space<vmem>>, %arg2: memref<32x64xf32, #tpu.memory_space<vmem>>, %arg3: memref<1x64xf32, #tpu.memory_space<vmem>>, %arg4: memref<24x64xf32, #tpu.memory_space<vmem>>) attributes {dimension_semantics = [#tpu.dimension_semantics<parallel>], iteration_bounds = array<i64: 1>, scalar_prefetch = 0 : i64, scratch_operands = 0 : i64, tpu.core_type = #tpu.core_type<tc>, window_params = [{transform_indices = @transform_0, window_bounds = array<i64: 24, 32>}, {pipeline_mode = #tpu.pipeline_mode<synchronous>, transform_indices = @transform_1, window_bounds = array<i64: 32, 64>}, {pipeline_mode = #tpu.pipeline_mode<synchronous>, transform_indices = @transform_2, window_bounds = array<i64: 1, 64>}, {transform_indices = @transform_3, window_bounds = array<i64: 24, 64>}]} {
    %c0 = arith.constant 0 : index
    %c0_0 = arith.constant 0 : index
    %0 = vector.load %arg1[%c0, %c0_0] : memref<24x32xf32, #tpu.memory_space<vmem>>, vector<24x32xf32>
    %c0_1 = arith.constant 0 : index
    %c0_2 = arith.constant 0 : index
    %1 = vector.load %arg2[%c0_1, %c0_2] : memref<32x64xf32, #tpu.memory_space<vmem>>, vector<32x64xf32>
    %cst = arith.constant dense<0.000000e+00> : vector<24x64xf32>
    %2 = tpu.matmul %0, %1, %cst {dimension_numbers = #tpu.dot_dimension_numbers<[1], [0], [0], [1], [0, 0, 1, 1], [], []>} : vector<24x32xf32>, vector<32x64xf32>, vector<24x64xf32> -> vector<24x64xf32>
    %c0_3 = arith.constant 0 : index
    %c0_4 = arith.constant 0 : index
    %3 = vector.load %arg3[%c0_3, %c0_4] : memref<1x64xf32, #tpu.memory_space<vmem>>, vector<1x64xf32>
    %4 = vector.broadcast %3 : vector<1x64xf32> to vector<24x64xf32>
    %5 = arith.addf %2, %4 : vector<24x64xf32>
    %c0_5 = arith.constant 0 : index
    %c0_6 = arith.constant 0 : index
    %6 = vector.load %arg4[%c0_5, %c0_6] : memref<24x64xf32, #tpu.memory_space<vmem>>, vector<24x64xf32>
    tpu.vector_store %arg4[%c0_5, %c0_6], %5 {strides = array<i32>} : memref<24x64xf32, #tpu.memory_space<vmem>>, vector<24x64xf32>,
    return
  }
  func.func @transform_0(%arg0: i32) -> (i32, i32) {
    %c0_i32 = arith.constant 0 : i32
    %c0_i32_0 = arith.constant 0 : i32
    return %arg0, %c0_i32 : i32, i32
  }
  func.func @transform_1(%arg0: i32) -> (i32, i32) {
    %c0_i32 = arith.constant 0 : i32
    %c0_i32_0 = arith.constant 0 : i32
    %c0_i32_1 = arith.constant 0 : i32
    return %c0_i32, %c0_i32_0 : i32, i32
  }
  func.func @transform_2(%arg0: i32) -> (i32, i32) {
    %c0_i32 = arith.constant 0 : i32
    %c0_i32_0 = arith.constant 0 : i32
    %c0_i32_1 = arith.constant 0 : i32
    return %c0_i32, %c0_i32_0 : i32, i32
  }
  func.func @transform_3(%arg0: i32) -> (i32, i32) {
    %c0_i32 = arith.constant 0 : i32
    %c0_i32_0 = arith.constant 0 : i32
    return %arg0, %c0_i32 : i32, i32
  }
}

</mosaic_0001>

<llo_original>
// kernel: tpu_custom_call.1
$region0: #{tpu_custom_call.1}
  #allocation0 [shape = 'u32[]', space=smem, size = 0x4, offset = 0x4, fixed_abs, tag = 'smem constant byte address 0x4 - core index']
  #allocation1 [shape = 'u32[144,128]{1,0:T(1,128)}', space=vmem, size = 0x12000, scoped, tag = 'internal scratch']
  %s0 = inlined_call_operand.hbm [shape: f32[18,32], index: 0, kind: input, shape index: {}]
  %s1 = inlined_call_operand.hbm [shape: f32[32,64], index: 1, kind: input, shape index: {}]
  %s2 = inlined_call_operand.vmem [shape: f32[1,64], index: 2, kind: input, shape index: {}]
  %s3 = inlined_call_operand.hbm [shape: f32[18,64], index: 3, kind: output, shape index: {}]
  %s4 = sld [smem:[#allocation0]]
  $region30: #{tpu_custom_call.1} parent=0
    _
  %s6 = ssub.s32 1, %s4
  %s7 = scalar_select 0, %s6, %s4
  $region1: #{tpu_custom_call.1} parent=0
    #allocation2 [shape = 'u8[12288]{0}', space=vmem, size = 0x3000, scoped, tag = 'input window, operand 0, single buffered']
    #allocation3 [shape = 's32[1]{0}', space=sflag, size = 0x4, scoped, tag = 'scoped memory for tpu_custom_call.1']
    #allocation4 [shape = 's32[1]{0}', space=sflag, size = 0x4, scoped, tag = 'scoped memory for tpu_custom_call.1']
    #allocation5 [shape = 'u8[16384]{0}', space=vmem, size = 0x4000, scoped, tag = 'input window, operand 1, single buffered']
    #allocation6 [shape = 's32[1]{0}', space=sflag, size = 0x4, scoped, tag = 'scoped memory for tpu_custom_call.1']
    #allocation7 [shape = 'u8[12288]{0}', space=vmem, size = 0x3000, scoped, tag = 'output window, operand 0, single buffered']
    %8 = vsyncpa [#allocation3], 0
    %9 = vsyncpa [#allocation6], 0
    %10 = vsyncpa [#allocation4], 0
    // Predicated region
    $region2: #{tpu_custom_call.1} parent=1 // pred_check
      _
    $region3: #{tpu_custom_call.1} parent=1 // pred_check_branch
      %12 = sbr.rel (0) target = $region5
    $region4: #{tpu_custom_call.1} parent=1 // pred_region
      %s14 = ssub.s32 384, 384
      %15 = vsyncadd [#allocation3], %s14
      %s16 = sshll.u32 [#allocation2], 4
      %s17 = int_to_ptr.vmem [resolvable:$true] %s16
      %22 = dma.hbm_to_vmem [thread:$0]  %s0, 384, %s17, [#allocation3], 128, 128, 8
    $region5: #{tpu_custom_call.1} parent=1 // pred_fallthru
      _
    // Predicated region
    $region6: #{tpu_custom_call.1} parent=1 // pred_check
      _
    $region7: #{tpu_custom_call.1} parent=1 // pred_check_branch
      %24 = sbr.rel (0) target = $region9
    $region8: #{tpu_custom_call.1} parent=1 // pred_region
      %s26 = ssub.s32 512, 512
      %27 = vsyncadd [#allocation6], %s26
      %s28 = sshll.u32 [#allocation5], 4
      %s29 = int_to_ptr.vmem [resolvable:$true] %s28
      %34 = dma.hbm_to_vmem [thread:$0]  %s1, 512, %s29, [#allocation6], 128, 128, 8
    $region9: #{tpu_custom_call.1} parent=1 // pred_fallthru
      _
    // Predicated region
    $region10: #{tpu_custom_call.1} parent=1 // pred_check
      _
    $region11: #{tpu_custom_call.1} parent=1 // pred_check_branch
      %36 = sbr.rel (0) target = $region13
    $region12: #{tpu_custom_call.1} parent=1 // pred_region
      _
    $region13: #{tpu_custom_call.1} parent=1 // pred_fallthru
      _
    // Predicated region
    $region14: #{tpu_custom_call.1} parent=1 // pred_check
      _
    $region15: #{tpu_custom_call.1} parent=1 // pred_check_branch
      %38 = sbr.rel (0) target = $region17
    $region16: #{tpu_custom_call.1} parent=1 // pred_region
      %39 = dma.done [#allocation3], 384
    $region17: #{tpu_custom_call.1} parent=1 // pred_fallthru
      _
    // Predicated region
    $region18: #{tpu_custom_call.1} parent=1 // pred_check
      _
    $region19: #{tpu_custom_call.1} parent=1 // pred_check_branch
      %41 = sbr.rel (0) target = $region21
    $region20: #{tpu_custom_call.1} parent=1 // pred_region
      %42 = dma.done [#allocation6], 512
    $region21: #{tpu_custom_call.1} parent=1 // pred_fallthru
      _
    %v43 = vld [vmem:[#allocation2] sm:$0xff]
    %v44 = vld [vmem:[#allocation2 + $0x8] sm:$0xff]
    %v45 = vld [vmem:[#allocation2 + $0x10] sm:$0xff]
    %v46 = vld [vmem:[#allocation5] sm:$0xff]
    %v47 = vld [vmem:[#allocation5 + $0x8] sm:$0xff]
    %v48 = vld [vmem:[#allocation5 + $0x10] sm:$0xff]
    %v49 = vld [vmem:[#allocation5 + $0x18] sm:$0xff]
    %v50 = vld [vmem:[%s2] sm:$0x1]
    %v52 = vlaneseq
    %v53 = vshrl.u32 %v52, 7
    %v54 = vsub.s32 0, %v53
    %v55 = vrot.slane %v50, %v54
    %vm57 = vcmask 261120
    %v59 = vsel %vm57, %v43, 0
    %v62 = vsel %vm57, %v44, 0
    %v65 = vsel %vm57, %v45, 0
    %67 = vmatprep.subr.mxu0 0.0
    %68 = vmatpush1.msra.mxu0 %v46
    %69 = vmatprep.subr.mxu0 0.0
    %70 = vmatpush1.msra.mxu0 %v47
    %71 = vmatprep.subr.mxu0 0.0
    %72 = vmatpush1.msra.mxu0 %v48
    %73 = vmatprep.subr.mxu0 0.0
    %74 = vmatpush1.msra.mxu0 %v49
    %75 = vmatprep.subr.mxu0 0.0
    %76 = vmatpush1.msra.mxu0 0.0
    %77 = vmatprep.subr.mxu0 0.0
    %78 = vmatpush1.msra.mxu0 0.0
    %79 = vmatprep.subr.mxu0 0.0
    %80 = vmatpush1.msra.mxu0 0.0
    %81 = vmatprep.subr.mxu0 0.0
    %82 = vmatpush1.msra.mxu0 0.0
    %83 = vmatprep.subr.mxu0 0.0
    %84 = vmatpush1.msra.mxu0 0.0
    %85 = vmatprep.subr.mxu0 0.0
    %86 = vmatpush1.msra.mxu0 0.0
    %87 = vmatprep.subr.mxu0 0.0
    %88 = vmatpush1.msra.mxu0 0.0
    %89 = vmatprep.subr.mxu0 0.0
    %90 = vmatpush1.msra.mxu0 0.0
    %91 = vmatprep.subr.mxu0 0.0
    %92 = vmatpush1.msra.mxu0 0.0
    %93 = vmatprep.subr.mxu0 0.0
    %94 = vmatpush1.msra.mxu0 0.0
    %95 = vmatprep.subr.mxu0 0.0
    %96 = vmatpush1.msra.mxu0 0.0
    %97 = vmatprep.subr.mxu0 0.0
    %98 = vmatpush1.msra.mxu0 0.0
    %99 = vmatprep.subr.mxu0 0.0
    %100 = vmatpush1.msra.mxu0 0.0
    %101 = vmatprep.subr.mxu0 0.0
    %102 = vmatpush1.msra.mxu0 0.0
    %103 = vmatprep.subr.mxu0 0.0
    %104 = vmatpush1.msra.mxu0 0.0
    %105 = vmatprep.subr.mxu0 0.0
    %106 = vmatpush1.msra.mxu0 0.0
    %107 = vmatprep.subr.mxu0 0.0
    %108 = vmatpush1.msra.mxu0 0.0
    %109 = vmatprep.subr.mxu0 0.0
    %110 = vmatpush1.msra.mxu0 0.0
    %111 = vmatprep.subr.mxu0 0.0
    %112 = vmatpush1.msra.mxu0 0.0
    %113 = vmatprep.subr.mxu0 0.0
    %114 = vmatpush1.msra.mxu0 0.0
    %115 = vmatprep.subr.mxu0 0.0
    %116 = vmatpush1.msra.mxu0 0.0
    %117 = vmatprep.subr.mxu0 0.0
    %118 = vmatpush1.msra.mxu0 0.0
    %119 = vmatprep.subr.mxu0 0.0
    %120 = vmatpush1.msra.mxu0 0.0
    %121 = vmatprep.subr.mxu0 0.0
    %122 = vmatpush1.msra.mxu0 0.0
    %123 = vmatprep.subr.mxu0 0.0
    %124 = vmatpush1.msra.mxu0 0.0
    %125 = vmatprep.subr.mxu0 0.0
    %126 = vmatpush1.msra.mxu0 0.0
    %127 = vmatprep.subr.mxu0 0.0
    %128 = vmatpush1.msra.mxu0 0.0
    %129 = vmatprep.subr.mxu0 0.0
    %130 = vmatpush1.msra.mxu0 0.0
    %131 = vmatprep.mubr.f32.mxu0 0.0
    %132 = vmatmul.mubr.f32.gmra.mrb[0].mxu0 %v59
    %v133 = vpop.f32.mrb[0].mxu0
    %v134 = vadd.f32 %v55, %v133
    %v135 = vpop.f32.mrb[0].mxu0
    %136 = vmatprep.mubr.f32.mxu0 0.0
    %137 = vmatmul.mubr.f32.gmra.mrb[0].mxu0 %v62
    %v138 = vpop.f32.mrb[0].mxu0
    %v139 = vadd.f32 %v55, %v138
    %v140 = vpop.f32.mrb[0].mxu0
    %141 = vmatprep.mubr.f32.mxu0 0.0
    %142 = vmatmul.mubr.f32.gmra.mrb[0].mxu0 %v65
    %v143 = vpop.f32.mrb[0].mxu0
    %v144 = vadd.f32 %v55, %v143
    %v145 = vpop.f32.mrb[0].mxu0
    %146 = vdwg.mxu0
    %vm147 = vcmask 523264
    %148 = vst.msk [vmem:[#allocation7] sm:$0xff] %vm147, %v134
    %149 = vst.msk [vmem:[#allocation7 + $0x8] sm:$0xff] %vm147, %v139
    %150 = vst.msk [vmem:[#allocation7 + $0x10] sm:$0xff] %vm147, %v144
    // Predicated region
    $region22: #{tpu_custom_call.1} parent=1 // pred_check
      _
    $region23: #{tpu_custom_call.1} parent=1 // pred_check_branch
      %152 = sbr.rel (0) target = $region25
    $region24: #{tpu_custom_call.1} parent=1 // pred_region
      %s154 = ssub.s32 384, 384
      %155 = vsyncadd [#allocation4], %s154
      %s156 = sshll.u32 [#allocation7], 4
      %s157 = int_to_ptr.vmem [resolvable:$true] %s156
      %162 = dma.vmem_to_hbm [thread:$0]  %s157, 384, %s3, [#allocation4], 128, 128, 8
    $region25: #{tpu_custom_call.1} parent=1 // pred_fallthru
      _
    // Predicated region
    $region26: #{tpu_custom_call.1} parent=1 // pred_check
      _
    $region27: #{tpu_custom_call.1} parent=1 // pred_check_branch
      %164 = sbr.rel (0) target = $region29
    $region28: #{tpu_custom_call.1} parent=1 // pred_region
      %165 = dma.done [#allocation4], 384
    $region29: #{tpu_custom_call.1} parent=1 // pred_fallthru
      _
    %166 = vsyncpa [#allocation3], 1
    %167 = vsyncpa [#allocation6], 1
    %168 = vsyncpa [#allocation4], 1

</llo_original>
